<compile_context>
chip_gen: v5e
topology: v5e:2x2
jax: 0.10.0
libtpu: 0.0.40
codegen_flags: <defaults>
</compile_context>

<pallas_src>
import jax
import jax.numpy as jnp
from jax.experimental import pallas as pl
from jax.experimental.pallas import tpu as pltpu

MARGIN = 5.0        # MarginLoss(margin=5.0)
NORM_EPS = 1e-12    # torch.nn.functional.normalize default eps


def transe_negsampling_loss_kernel(ht_idx_ref, r_idx_ref, ent_ref, rel_ref,
                                   loss_ref):
    """Fused embedding gather + TransE L1 score + margin-hinge mean.

    ht_idx_ref : (2N, 1) int32 VMEM -- head indices [0:N], tail indices [N:2N],
                 N = (1+K)*B in OpenKE flat order (positives first).
    r_idx_ref  : (B, 1)  int32 VMEM -- positive relations only (mode='normal':
                 corrupted triples reuse the positive's relation).
    ent_ref    : (E, D) f32 VMEM    -- full entity embedding table.
    rel_ref    : (R, D) f32 VMEM    -- full relation embedding table.
    loss_ref   : (1,)  f32 SMEM     -- scalar loss output.
    """
    two_n = ht_idx_ref.shape[0]
    n_total = two_n // 2
    bsz = r_idx_ref.shape[0]
    groups = n_total // bsz           # 1 positive group + K negative groups
    num_neg = groups - 1
    dim = ent_ref.shape[1]
    rel_tot = rel_ref.shape[0]

    def l2_normalize(x):
        # x / max(||x||, eps) == x * rsqrt(max(sum x^2, eps^2)); rsqrt -> EUP slot.
        ssq = jnp.sum(x * x, axis=-1, keepdims=True)
        return x * jax.lax.rsqrt(jnp.maximum(ssq, NORM_EPS * NORM_EPS))

    # ---- single merged h/t gather: one (2N,E) one-hot -> one MXU issue ------
    # NOTE: an out-of-range index yields an all-zero one-hot row (silent zero
    # embedding) instead of raising like torch indexing would.
    ent = ent_ref[...]                                               # (E, D)
    ht_idx = ht_idx_ref[...]                                         # (2N, 1)
    iota = jax.lax.broadcasted_iota(jnp.int32, (two_n, ent.shape[0]), 1)
    onehot = (ht_idx == iota).astype(ent.dtype)                      # (2N, E)
    # TODO(synk): on v6e/v7x the gather matmul can run with bf16 operands
    # (f32 accumulation) for ~3-6x fewer MXU passes, at the cost of rounding
    # the gathered table rows; kept f32 here to preserve 1e-5 parity.
    ht = jnp.dot(onehot, ent, preferred_element_type=jnp.float32)    # (2N, D)
    ht = l2_normalize(ht)
    h = ht[0:n_total, :]                                             # (N, D)
    t = ht[n_total:two_n, :]                                         # (N, D)

    # ---- relation gather on the VPU (rel_tot tiny): static K-way select -----
    rel = rel_ref[...]                                               # (R, D)
    r_idx = r_idx_ref[...]                                           # (B, 1)
    r = jnp.zeros((bsz, dim), jnp.float32)
    for j in range(rel_tot):                                         # static unroll
        r = jnp.where(r_idx == j, rel[j], r)                         # (B, D)
    r = l2_normalize(r)

    # ---- TransE score + margin hinge, group-sliced (no 3-D reshape) ---------
    # p_norm = 1 -> L1 norm of (h + r - t) over the embedding dim.
    delta = h - t                                                    # (N, D)
    p_score = jnp.sum(jnp.abs(delta[0:bsz, :] + r),
                      axis=-1, keepdims=True)                        # (B, 1)
    hinge_sum = jnp.zeros((bsz, 1), jnp.float32)
    for g in range(1, groups):                                       # static unroll
        n_slice = delta[g * bsz:(g + 1) * bsz, :] + r                # (B, D)
        n_score = jnp.sum(jnp.abs(n_slice), axis=-1, keepdims=True)  # (B, 1)
        hinge_sum = hinge_sum + (jnp.maximum(p_score - n_score, -MARGIN) + MARGIN)
    loss_ref[0] = jnp.sum(hinge_sum) * (1.0 / float(num_neg * bsz))


def graph_structure_generator_forward(ent_emb, rel_emb,
                                      batch_h, batch_t, batch_r,
                                      batch_size):
    """Forward of GraphStructureGenerator (kge_model='TransE', mode='normal').

    Precondition: batch_r is the positive relations tiled (1+K) times
    (OpenKE mode='normal'); only batch_r[:batch_size] is read.
    """
    n_total = batch_h.shape[0]
    assert n_total % batch_size == 0
    groups = n_total // batch_size
    ent_tot, dim = ent_emb.shape
    rel_tot = rel_emb.shape[0]

    # Cheap precondition check when inputs are concrete (skipped under tracing).
    if not isinstance(batch_r, jax.core.Tracer):
        tiled = jnp.reshape(batch_r, (groups, batch_size))
        assert bool(jnp.all(tiled == tiled[0:1])), (
            "kernel assumes mode='normal': batch_r must be the positive "
            "relations tiled (1+K) times")

    ent = ent_emb.astype(jnp.float32)
    rel = rel_emb.astype(jnp.float32)
    # Merge head + tail indices so the kernel does a single one-hot gather.
    ht_idx = jnp.concatenate(
        [batch_h.astype(jnp.int32), batch_t.astype(jnp.int32)],
        axis=0).reshape(2 * n_total, 1)
    r_idx = batch_r[:batch_size].astype(jnp.int32).reshape(batch_size, 1)

    # Advisory cost hint so XLA schedules surrounding HLOs sensibly.
    gather_flops = 2 * (2 * n_total) * ent_tot * dim
    elem_flops = 12 * (2 * n_total + batch_size) * dim
    bytes_accessed = 4 * (ent.size + rel.size + 2 * n_total + batch_size + 1)
    cost = pl.CostEstimate(flops=int(gather_flops + elem_flops),
                           transcendentals=int(2 * n_total + batch_size),
                           bytes_accessed=int(bytes_accessed))

    vmem = pl.BlockSpec(memory_space=pltpu.MemorySpace.VMEM)
    # TODO(synk): for production-sized KGE batches / entity tables, keep the
    # tables in HBM (memory_space=pl.ANY), feed the batch indices via
    # PrefetchScalarGridSpec scalar prefetch, gather rows with double-buffered
    # DMAs, tile the batch over a grid (dimension_semantics=("parallel",...) so
    # v7x's two TensorCores are both used) and accumulate the hinge sum with
    # init/finalize under pl.when, sized for v7x's 64 MiB VMEM.
    loss = pl.pallas_call(
        transe_negsampling_loss_kernel,
        out_shape=jax.ShapeDtypeStruct((1,), jnp.float32),
        in_specs=[vmem, vmem, vmem, vmem],
        out_specs=pl.BlockSpec(memory_space=pltpu.MemorySpace.SMEM),
        cost_estimate=cost,
    )(ht_idx, r_idx, ent, rel)
    return loss[0]


def _reference_loss(ent_emb, rel_emb, batch_h, batch_t, batch_r, batch_size):
    """Pure-JAX reference mirroring OpenKE NegativeSampling(TransE, MarginLoss)."""
    def norm(x):
        return x / jnp.maximum(jnp.linalg.norm(x, axis=-1, keepdims=True), NORM_EPS)
    h = norm(ent_emb[batch_h])
    t = norm(ent_emb[batch_t])
    r = norm(rel_emb[batch_r])
    score = jnp.sum(jnp.abs(h + r - t), axis=-1)                 # (N,)
    p = score[:batch_size].reshape(-1, batch_size).T             # (B, 1)
    n = score[batch_size:].reshape(-1, batch_size).T             # (B, K)
    return jnp.mean(jnp.maximum(p - n, -MARGIN) + MARGIN)


if __name__ == "__main__":
    key = jax.random.PRNGKey(0)
    k1, k2, k3, k4, k5 = jax.random.split(key, 5)

    # Synthetic sizes consistent with the module:
    #   meta_sources_cnt (ent_tot) = 64, meta_relations_cnt (rel_tot) = 4,
    #   cf.meta_emb_dim = 32, kge batch size B = 16, K = 4 negatives / positive.
    ent_tot, rel_tot, dim = 64, 4, 32
    batch_size, num_neg = 16, 4
    n_total = batch_size * (1 + num_neg)

    # Deterministic "xavier-like" parameter init (synthetic, no checkpoint).
    ent_emb = 0.1 * jax.random.normal(k1, (ent_tot, dim), jnp.float32)
    rel_emb = 0.1 * jax.random.normal(k2, (rel_tot, dim), jnp.float32)

    # OpenKE-ordered batch: first B positives, then K blocks of B corrupted
    # triples; negatives keep the positive's relation (mode='normal').
    batch_h = jax.random.randint(k3, (n_total,), 0, ent_tot, jnp.int32)
    batch_t = jax.random.randint(k4, (n_total,), 0, ent_tot, jnp.int32)
    pos_r = jax.random.randint(k5, (batch_size,), 0, rel_tot, jnp.int32)
    batch_r = jnp.tile(pos_r, 1 + num_neg)

    loss = graph_structure_generator_forward(
        ent_emb, rel_emb, batch_h, batch_t, batch_r, batch_size)
    jax.block_until_ready(loss)

    ref = _reference_loss(ent_emb, rel_emb, batch_h, batch_t, batch_r, batch_size)
    assert jnp.allclose(loss, ref, rtol=1e-5, atol=1e-5), (loss, ref)

    # TODO(synk): batch['mode'] != 'normal' (head_batch/tail_batch broadcast
    # scoring) and the TransR branch are not exercised by this module's
    # training path and are omitted.
    print("KERNEL_OK")
</pallas_src>

<mosaic_0001>
module attributes {stable_mosaic.version = 11 : i64} {
  func.func @transe_negsampling_loss_kernel(%arg0: memref<160x1xi32, #tpu.memory_space<vmem>>, %arg1: memref<16x1xi32, #tpu.memory_space<vmem>>, %arg2: memref<64x32xf32, #tpu.memory_space<vmem>>, %arg3: memref<4x32xf32, #tpu.memory_space<vmem>>, %arg4: memref<1xf32, #tpu.memory_space<smem>>) attributes {dimension_semantics = [], scalar_prefetch = 0 : i64, scratch_operands = 0 : i64, tpu.core_type = #tpu.core_type<tc>} {
    %c0 = arith.constant 0 : index
    %c0_0 = arith.constant 0 : index
    %0 = vector.load %arg2[%c0, %c0_0] : memref<64x32xf32, #tpu.memory_space<vmem>>, vector<64x32xf32>
    %c0_1 = arith.constant 0 : index
    %c0_2 = arith.constant 0 : index
    %1 = vector.load %arg0[%c0_1, %c0_2] : memref<160x1xi32, #tpu.memory_space<vmem>>, vector<160x1xi32>
    %2 = tpu.iota {dimensions = array<i32: 1>} : vector<160x64xi32>
    %3 = vector.broadcast %1 : vector<160x1xi32> to vector<160x64xi32>
    %4 = arith.cmpi eq, %3, %2 : vector<160x64xi32>
    %5 = arith.extui %4 : vector<160x64xi1> to vector<160x64xi32>
    %6 = arith.sitofp %5 : vector<160x64xi32> to vector<160x64xf32>
    %cst = arith.constant dense<0.000000e+00> : vector<160x32xf32>
    %7 = tpu.matmul %6, %0, %cst {dimension_numbers = #tpu.dot_dimension_numbers<[1], [0], [0], [1], [0, 0, 1, 1], [], []>} : vector<160x64xf32>, vector<64x32xf32>, vector<160x32xf32> -> vector<160x32xf32>
    %8 = arith.mulf %7, %7 : vector<160x32xf32>
    %cst_3 = arith.constant dense<0.000000e+00> : vector<160xf32>
    %9 = vector.multi_reduction <add>, %8, %cst_3 [1] : vector<160x32xf32> to vector<160xf32>
    %10 = vector.shape_cast %9 : vector<160xf32> to vector<160x1xf32>
    %cst_4 = arith.constant 1.000000e-24 : f32
    %11 = vector.broadcast %cst_4 : f32 to vector<160x1xf32>
    %12 = arith.maximumf %10, %11 : vector<160x1xf32>
    %13 = math.rsqrt %12 : vector<160x1xf32>
    %14 = vector.broadcast %13 : vector<160x1xf32> to vector<160x32xf32>
    %15 = arith.mulf %7, %14 : vector<160x32xf32>
    %16 = vector.extract_strided_slice %15 {offsets = [0, 0], sizes = [80, 32], strides = [1, 1]} : vector<160x32xf32> to vector<80x32xf32>
    %17 = vector.extract_strided_slice %15 {offsets = [80, 0], sizes = [80, 32], strides = [1, 1]} : vector<160x32xf32> to vector<80x32xf32>
    %c0_5 = arith.constant 0 : index
    %c0_6 = arith.constant 0 : index
    %18 = vector.load %arg3[%c0_5, %c0_6] : memref<4x32xf32, #tpu.memory_space<vmem>>, vector<4x32xf32>
    %c0_7 = arith.constant 0 : index
    %c0_8 = arith.constant 0 : index
    %19 = vector.load %arg1[%c0_7, %c0_8] : memref<16x1xi32, #tpu.memory_space<vmem>>, vector<16x1xi32>
    %cst_9 = arith.constant 0.000000e+00 : f32
    %20 = vector.broadcast %cst_9 : f32 to vector<16x32xf32>
    %c0_i32 = arith.constant 0 : i32
    %21 = vector.broadcast %c0_i32 : i32 to vector<16x1xi32>
    %22 = arith.cmpi eq, %19, %21 : vector<16x1xi32>
    %23 = vector.extract_strided_slice %18 {offsets = [0, 0], sizes = [1, 32], strides = [1, 1]} : vector<4x32xf32> to vector<1x32xf32>
    %24 = vector.shape_cast %23 : vector<1x32xf32> to vector<32xf32>
    %25 = vector.shape_cast %22 : vector<16x1xi1> to vector<16x1xi1>
    %26 = vector.broadcast %25 : vector<16x1xi1> to vector<16x32xi1>
    %27 = vector.shape_cast %24 : vector<32xf32> to vector<1x32xf32>
    %28 = vector.broadcast %27 : vector<1x32xf32> to vector<16x32xf32>
    %29 = arith.select %26, %28, %20 : vector<16x32xi1>, vector<16x32xf32>
    %c1_i32 = arith.constant 1 : i32
    %30 = vector.broadcast %c1_i32 : i32 to vector<16x1xi32>
    %31 = arith.cmpi eq, %19, %30 : vector<16x1xi32>
    %32 = vector.extract_strided_slice %18 {offsets = [1, 0], sizes = [1, 32], strides = [1, 1]} : vector<4x32xf32> to vector<1x32xf32>
    %33 = vector.shape_cast %32 : vector<1x32xf32> to vector<32xf32>
    %34 = vector.shape_cast %31 : vector<16x1xi1> to vector<16x1xi1>
    %35 = vector.broadcast %34 : vector<16x1xi1> to vector<16x32xi1>
    %36 = vector.shape_cast %33 : vector<32xf32> to vector<1x32xf32>
    %37 = vector.broadcast %36 : vector<1x32xf32> to vector<16x32xf32>
    %38 = arith.select %35, %37, %29 : vector<16x32xi1>, vector<16x32xf32>
    %c2_i32 = arith.constant 2 : i32
    %39 = vector.broadcast %c2_i32 : i32 to vector<16x1xi32>
    %40 = arith.cmpi eq, %19, %39 : vector<16x1xi32>
    %41 = vector.extract_strided_slice %18 {offsets = [2, 0], sizes = [1, 32], strides = [1, 1]} : vector<4x32xf32> to vector<1x32xf32>
    %42 = vector.shape_cast %41 : vector<1x32xf32> to vector<32xf32>
    %43 = vector.shape_cast %40 : vector<16x1xi1> to vector<16x1xi1>
    %44 = vector.broadcast %43 : vector<16x1xi1> to vector<16x32xi1>
    %45 = vector.shape_cast %42 : vector<32xf32> to vector<1x32xf32>
    %46 = vector.broadcast %45 : vector<1x32xf32> to vector<16x32xf32>
    %47 = arith.select %44, %46, %38 : vector<16x32xi1>, vector<16x32xf32>
    %c3_i32 = arith.constant 3 : i32
    %48 = vector.broadcast %c3_i32 : i32 to vector<16x1xi32>
    %49 = arith.cmpi eq, %19, %48 : vector<16x1xi32>
    %50 = vector.extract_strided_slice %18 {offsets = [3, 0], sizes = [1, 32], strides = [1, 1]} : vector<4x32xf32> to vector<1x32xf32>
    %51 = vector.shape_cast %50 : vector<1x32xf32> to vector<32xf32>
    %52 = vector.shape_cast %49 : vector<16x1xi1> to vector<16x1xi1>
    %53 = vector.broadcast %52 : vector<16x1xi1> to vector<16x32xi1>
    %54 = vector.shape_cast %51 : vector<32xf32> to vector<1x32xf32>
    %55 = vector.broadcast %54 : vector<1x32xf32> to vector<16x32xf32>
    %56 = arith.select %53, %55, %47 : vector<16x32xi1>, vector<16x32xf32>
    %57 = arith.mulf %56, %56 : vector<16x32xf32>
    %cst_10 = arith.constant dense<0.000000e+00> : vector<16xf32>
    %58 = vector.multi_reduction <add>, %57, %cst_10 [1] : vector<16x32xf32> to vector<16xf32>
    %59 = vector.shape_cast %58 : vector<16xf32> to vector<16x1xf32>
    %cst_11 = arith.constant 1.000000e-24 : f32
    %60 = vector.broadcast %cst_11 : f32 to vector<16x1xf32>
    %61 = arith.maximumf %59, %60 : vector<16x1xf32>
    %62 = math.rsqrt %61 : vector<16x1xf32>
    %63 = vector.broadcast %62 : vector<16x1xf32> to vector<16x32xf32>
    %64 = arith.mulf %56, %63 : vector<16x32xf32>
    %65 = arith.subf %16, %17 : vector<80x32xf32>
    %66 = vector.extract_strided_slice %65 {offsets = [0, 0], sizes = [16, 32], strides = [1, 1]} : vector<80x32xf32> to vector<16x32xf32>
    %67 = arith.addf %66, %64 : vector<16x32xf32>
    %68 = math.absf %67 : vector<16x32xf32>
    %cst_12 = arith.constant dense<0.000000e+00> : vector<16xf32>
    %69 = vector.multi_reduction <add>, %68, %cst_12 [1] : vector<16x32xf32> to vector<16xf32>
    %70 = vector.shape_cast %69 : vector<16xf32> to vector<16x1xf32>
    %cst_13 = arith.constant 0.000000e+00 : f32
    %71 = vector.broadcast %cst_13 : f32 to vector<16x1xf32>
    %72 = vector.extract_strided_slice %65 {offsets = [16, 0], sizes = [16, 32], strides = [1, 1]} : vector<80x32xf32> to vector<16x32xf32>
    %73 = arith.addf %72, %64 : vector<16x32xf32>
    %74 = math.absf %73 : vector<16x32xf32>
    %cst_14 = arith.constant dense<0.000000e+00> : vector<16xf32>
    %75 = vector.multi_reduction <add>, %74, %cst_14 [1] : vector<16x32xf32> to vector<16xf32>
    %76 = vector.shape_cast %75 : vector<16xf32> to vector<16x1xf32>
    %77 = arith.subf %70, %76 : vector<16x1xf32>
    %cst_15 = arith.constant -5.000000e+00 : f32
    %78 = vector.broadcast %cst_15 : f32 to vector<16x1xf32>
    %79 = arith.maximumf %77, %78 : vector<16x1xf32>
    %cst_16 = arith.constant 5.000000e+00 : f32
    %80 = vector.broadcast %cst_16 : f32 to vector<16x1xf32>
    %81 = arith.addf %79, %80 : vector<16x1xf32>
    %82 = arith.addf %71, %81 : vector<16x1xf32>
    %83 = vector.extract_strided_slice %65 {offsets = [32, 0], sizes = [16, 32], strides = [1, 1]} : vector<80x32xf32> to vector<16x32xf32>
    %84 = arith.addf %83, %64 : vector<16x32xf32>
    %85 = math.absf %84 : vector<16x32xf32>
    %cst_17 = arith.constant dense<0.000000e+00> : vector<16xf32>
    %86 = vector.multi_reduction <add>, %85, %cst_17 [1] : vector<16x32xf32> to vector<16xf32>
    %87 = vector.shape_cast %86 : vector<16xf32> to vector<16x1xf32>
    %88 = arith.subf %70, %87 : vector<16x1xf32>
    %cst_18 = arith.constant -5.000000e+00 : f32
    %89 = vector.broadcast %cst_18 : f32 to vector<16x1xf32>
    %90 = arith.maximumf %88, %89 : vector<16x1xf32>
    %cst_19 = arith.constant 5.000000e+00 : f32
    %91 = vector.broadcast %cst_19 : f32 to vector<16x1xf32>
    %92 = arith.addf %90, %91 : vector<16x1xf32>
    %93 = arith.addf %82, %92 : vector<16x1xf32>
    %94 = vector.extract_strided_slice %65 {offsets = [48, 0], sizes = [16, 32], strides = [1, 1]} : vector<80x32xf32> to vector<16x32xf32>
    %95 = arith.addf %94, %64 : vector<16x32xf32>
    %96 = math.absf %95 : vector<16x32xf32>
    %cst_20 = arith.constant dense<0.000000e+00> : vector<16xf32>
    %97 = vector.multi_reduction <add>, %96, %cst_20 [1] : vector<16x32xf32> to vector<16xf32>
    %98 = vector.shape_cast %97 : vector<16xf32> to vector<16x1xf32>
    %99 = arith.subf %70, %98 : vector<16x1xf32>
    %cst_21 = arith.constant -5.000000e+00 : f32
    %100 = vector.broadcast %cst_21 : f32 to vector<16x1xf32>
    %101 = arith.maximumf %99, %100 : vector<16x1xf32>
    %cst_22 = arith.constant 5.000000e+00 : f32
    %102 = vector.broadcast %cst_22 : f32 to vector<16x1xf32>
    %103 = arith.addf %101, %102 : vector<16x1xf32>
    %104 = arith.addf %93, %103 : vector<16x1xf32>
    %105 = vector.extract_strided_slice %65 {offsets = [64, 0], sizes = [16, 32], strides = [1, 1]} : vector<80x32xf32> to vector<16x32xf32>
    %106 = arith.addf %105, %64 : vector<16x32xf32>
    %107 = math.absf %106 : vector<16x32xf32>
    %cst_23 = arith.constant dense<0.000000e+00> : vector<16xf32>
    %108 = vector.multi_reduction <add>, %107, %cst_23 [1] : vector<16x32xf32> to vector<16xf32>
    %109 = vector.shape_cast %108 : vector<16xf32> to vector<16x1xf32>
    %110 = arith.subf %70, %109 : vector<16x1xf32>
    %cst_24 = arith.constant -5.000000e+00 : f32
    %111 = vector.broadcast %cst_24 : f32 to vector<16x1xf32>
    %112 = arith.maximumf %110, %111 : vector<16x1xf32>
    %cst_25 = arith.constant 5.000000e+00 : f32
    %113 = vector.broadcast %cst_25 : f32 to vector<16x1xf32>
    %114 = arith.addf %112, %113 : vector<16x1xf32>
    %115 = arith.addf %104, %114 : vector<16x1xf32>
    %116 = vector.shape_cast %115 : vector<16x1xf32> to vector<1x16x1xf32>
    %cst_26 = arith.constant dense<0.000000e+00> : vector<1xf32>
    %117 = vector.multi_reduction <add>, %116, %cst_26 [1, 2] : vector<1x16x1xf32> to vector<1xf32>
    %118 = vector.shape_cast %117 : vector<1xf32> to vector<1x1x1xf32>
    %119 = vector.extract %118[0, 0, 0] : f32 from vector<1x1x1xf32>
    %cst_27 = arith.constant 1.562500e-02 : f32
    %120 = arith.mulf %119, %cst_27 : f32
    %c0_28 = arith.constant 0 : index
    %121 = memref.load %arg4[%c0_28] : memref<1xf32, #tpu.memory_space<smem>>
    memref.store %120, %arg4[%c0_28] : memref<1xf32, #tpu.memory_space<smem>>
    return
  }
}

</mosaic_0001>

<llo_original>
// kernel: tpu_custom_call.1
$region0: #{tpu_custom_call.1}
  #allocation0 [shape = 'u32[]', space=smem, size = 0x4, offset = 0x4, fixed_abs, tag = 'smem constant byte address 0x4 - core index']
  #allocation1 [shape = 'u32[72,128]{1,0:T(1,128)}', space=vmem, size = 0x9000, scoped, tag = 'internal scratch']
  %s0 = inlined_call_operand.vmem [shape: s32[160,1], index: 0, kind: input, shape index: {}]
  %s1 = inlined_call_operand.vmem [shape: s32[16,1], index: 1, kind: input, shape index: {}]
  %s2 = inlined_call_operand.vmem [shape: f32[64,32], index: 2, kind: input, shape index: {}]
  %s3 = inlined_call_operand.vmem [shape: f32[4,32], index: 3, kind: input, shape index: {}]
  %s4 = inlined_call_operand.hbm [shape: f32[1], index: 4, kind: output, shape index: {}]
  %s5 = sld [smem:[#allocation0]]
  $region26: #{tpu_custom_call.1} parent=0
    _
  %s7 = ssub.s32 1, %s5
  %s8 = scalar_select 0, %s7, %s5
  $region1: #{tpu_custom_call.1} parent=0
    #allocation2 [shape = 'u8[512]{0}', space=smem, size = 0x200, scoped, tag = 'output window, operand 0, single buffered']
    #allocation3 [shape = 's32[1]{0}', space=sflag, size = 0x4, scoped, tag = 'scoped memory for tpu_custom_call.1']
    %9 = vsyncpa [#allocation3], 0
    // Predicated region
    $region2: #{tpu_custom_call.1} parent=1 // pred_check
      _
    $region3: #{tpu_custom_call.1} parent=1 // pred_check_branch
      %11 = sbr.rel (0) target = $region5
    $region4: #{tpu_custom_call.1} parent=1 // pred_region
      _
    $region5: #{tpu_custom_call.1} parent=1 // pred_fallthru
      _
    // Predicated region
    $region6: #{tpu_custom_call.1} parent=1 // pred_check
      _
    $region7: #{tpu_custom_call.1} parent=1 // pred_check_branch
      %13 = sbr.rel (0) target = $region9
    $region8: #{tpu_custom_call.1} parent=1 // pred_region
      _
    $region9: #{tpu_custom_call.1} parent=1 // pred_fallthru
      _
    // Predicated region
    $region10: #{tpu_custom_call.1} parent=1 // pred_check
      _
    $region11: #{tpu_custom_call.1} parent=1 // pred_check_branch
      %15 = sbr.rel (0) target = $region13
    $region12: #{tpu_custom_call.1} parent=1 // pred_region
      _
    $region13: #{tpu_custom_call.1} parent=1 // pred_fallthru
      _
    // Predicated region
    $region14: #{tpu_custom_call.1} parent=1 // pred_check
      _
    $region15: #{tpu_custom_call.1} parent=1 // pred_check_branch
      %17 = sbr.rel (0) target = $region17
    $region16: #{tpu_custom_call.1} parent=1 // pred_region
      _
    $region17: #{tpu_custom_call.1} parent=1 // pred_fallthru
      _
    %v18 = vld [vmem:[%s2] sm:$0xff]
    %v19 = vld [vmem:[%s2 + $0x8] sm:$0xff]
    %v20 = vld [vmem:[%s2 + $0x10] sm:$0xff]
    %v21 = vld [vmem:[%s2 + $0x18] sm:$0xff]
    %v22 = vld [vmem:[%s2 + $0x20] sm:$0xff]
    %v23 = vld [vmem:[%s2 + $0x28] sm:$0xff]
    %v24 = vld [vmem:[%s2 + $0x30] sm:$0xff]
    %v25 = vld [vmem:[%s2 + $0x38] sm:$0xff]
    %v26 = vld [vmem:[%s0] sm:$0xff]
    %v27 = vld [vmem:[%s0 + $0x8] sm:$0xff]
    %v28 = vld [vmem:[%s0 + $0x10] sm:$0xff]
    %v29 = vld [vmem:[%s0 + $0x18] sm:$0xff]
    %v30 = vld [vmem:[%s0 + $0x20] sm:$0xff]
    %v31 = vld [vmem:[%s0 + $0x28] sm:$0xff]
    %v32 = vld [vmem:[%s0 + $0x30] sm:$0xff]
    %v33 = vld [vmem:[%s0 + $0x38] sm:$0xff]
    %v34 = vld [vmem:[%s0 + $0x40] sm:$0xff]
    %v35 = vld [vmem:[%s0 + $0x48] sm:$0xff]
    %v36 = vld [vmem:[%s0 + $0x50] sm:$0xff]
    %v37 = vld [vmem:[%s0 + $0x58] sm:$0xff]
    %v38 = vld [vmem:[%s0 + $0x60] sm:$0xff]
    %v39 = vld [vmem:[%s0 + $0x68] sm:$0xff]
    %v40 = vld [vmem:[%s0 + $0x70] sm:$0xff]
    %v41 = vld [vmem:[%s0 + $0x78] sm:$0xff]
    %v42 = vld [vmem:[%s0 + $0x80] sm:$0xff]
    %v43 = vld [vmem:[%s0 + $0x88] sm:$0xff]
    %v44 = vld [vmem:[%s0 + $0x90] sm:$0xff]
    %v45 = vld [vmem:[%s0 + $0x98] sm:$0xff]
    %v46 = vlaneseq
    %v47 = vand.u32 %v46, 127
    %48 = vset.pattern.permute.xlu0 0
    %49 = vperm.xlu0 %48, %v26
    %v50 = vpop.permute.xlu0 %49
    %51 = vset.pattern.permute.xlu0 0
    %52 = vperm.xlu0 %51, %v27
    %v53 = vpop.permute.xlu0 %52
    %54 = vset.pattern.permute.xlu0 0
    %55 = vperm.xlu0 %54, %v28
    %v56 = vpop.permute.xlu0 %55
    %57 = vset.pattern.permute.xlu0 0
    %58 = vperm.xlu0 %57, %v29
    %v59 = vpop.permute.xlu0 %58
    %60 = vset.pattern.permute.xlu0 0
    %61 = vperm.xlu0 %60, %v30
    %v62 = vpop.permute.xlu0 %61
    %63 = vset.pattern.permute.xlu0 0
    %64 = vperm.xlu0 %63, %v31
    %v65 = vpop.permute.xlu0 %64
    %66 = vset.pattern.permute.xlu0 0
    %67 = vperm.xlu0 %66, %v32
    %v68 = vpop.permute.xlu0 %67
    %69 = vset.pattern.permute.xlu0 0
    %70 = vperm.xlu0 %69, %v33
    %v71 = vpop.permute.xlu0 %70
    %72 = vset.pattern.permute.xlu0 0
    %73 = vperm.xlu0 %72, %v34
    %v74 = vpop.permute.xlu0 %73
    %75 = vset.pattern.permute.xlu0 0
    %76 = vperm.xlu0 %75, %v35
    %v77 = vpop.permute.xlu0 %76
    %78 = vset.pattern.permute.xlu0 0
    %79 = vperm.xlu0 %78, %v36
    %v80 = vpop.permute.xlu0 %79
    %81 = vset.pattern.permute.xlu0 0
    %82 = vperm.xlu0 %81, %v37
    %v83 = vpop.permute.xlu0 %82
    %84 = vset.pattern.permute.xlu0 0
    %85 = vperm.xlu0 %84, %v38
    %v86 = vpop.permute.xlu0 %85
    %87 = vset.pattern.permute.xlu0 0
    %88 = vperm.xlu0 %87, %v39
    %v89 = vpop.permute.xlu0 %88
    %90 = vset.pattern.permute.xlu0 0
    %91 = vperm.xlu0 %90, %v40
    %v92 = vpop.permute.xlu0 %91
    %93 = vset.pattern.permute.xlu0 0
    %94 = vperm.xlu0 %93, %v41
    %v95 = vpop.permute.xlu0 %94
    %96 = vset.pattern.permute.xlu0 0
    %97 = vperm.xlu0 %96, %v42
    %v98 = vpop.permute.xlu0 %97
    %99 = vset.pattern.permute.xlu0 0
    %100 = vperm.xlu0 %99, %v43
    %v101 = vpop.permute.xlu0 %100
    %102 = vset.pattern.permute.xlu0 0
    %103 = vperm.xlu0 %102, %v44
    %v104 = vpop.permute.xlu0 %103
    %105 = vset.pattern.permute.xlu0 0
    %106 = vperm.xlu0 %105, %v45
    %v107 = vpop.permute.xlu0 %106
    %vm108 = vcmp.eq.s32.totalorder %v50, %v47
    %vm109 = vcmp.eq.s32.totalorder %v53, %v47
    %vm110 = vcmp.eq.s32.totalorder %v56, %v47
    %vm111 = vcmp.eq.s32.totalorder %v59, %v47
    %vm112 = vcmp.eq.s32.totalorder %v62, %v47
    %vm113 = vcmp.eq.s32.totalorder %v65, %v47
    %vm114 = vcmp.eq.s32.totalorder %v68, %v47
    %vm115 = vcmp.eq.s32.totalorder %v71, %v47
    %vm116 = vcmp.eq.s32.totalorder %v74, %v47
    %vm117 = vcmp.eq.s32.totalorder %v77, %v47
    %vm118 = vcmp.eq.s32.totalorder %v80, %v47
    %vm119 = vcmp.eq.s32.totalorder %v83, %v47
    %vm120 = vcmp.eq.s32.totalorder %v86, %v47
    %vm121 = vcmp.eq.s32.totalorder %v89, %v47
    %vm122 = vcmp.eq.s32.totalorder %v92, %v47
    %vm123 = vcmp.eq.s32.totalorder %v95, %v47
    %vm124 = vcmp.eq.s32.totalorder %v98, %v47
    %vm125 = vcmp.eq.s32.totalorder %v101, %v47
    %vm126 = vcmp.eq.s32.totalorder %v104, %v47
    %vm127 = vcmp.eq.s32.totalorder %v107, %v47
    %v128 = vsel %vm108, 1, 0
    %v129 = vsel %vm109, 1, 0
    %v130 = vsel %vm110, 1, 0
    %v131 = vsel %vm111, 1, 0
    %v132 = vsel %vm112, 1, 0
    %v133 = vsel %vm113, 1, 0
    %v134 = vsel %vm114, 1, 0
    %v135 = vsel %vm115, 1, 0
    %v136 = vsel %vm116, 1, 0
    %v137 = vsel %vm117, 1, 0
    %v138 = vsel %vm118, 1, 0
    %v139 = vsel %vm119, 1, 0
    %v140 = vsel %vm120, 1, 0
    %v141 = vsel %vm121, 1, 0
    %v142 = vsel %vm122, 1, 0
    %v143 = vsel %vm123, 1, 0
    %v144 = vsel %vm124, 1, 0
    %v145 = vsel %vm125, 1, 0
    %v146 = vsel %vm126, 1, 0
    %v147 = vsel %vm127, 1, 0
    %v148 = vcvt.s32.f32 %v128
    %v149 = vcvt.s32.f32 %v129
    %v150 = vcvt.s32.f32 %v130
    %v151 = vcvt.s32.f32 %v131
    %v152 = vcvt.s32.f32 %v132
    %v153 = vcvt.s32.f32 %v133
    %v154 = vcvt.s32.f32 %v134
    %v155 = vcvt.s32.f32 %v135
    %v156 = vcvt.s32.f32 %v136
    %v157 = vcvt.s32.f32 %v137
    %v158 = vcvt.s32.f32 %v138
    %v159 = vcvt.s32.f32 %v139
    %v160 = vcvt.s32.f32 %v140
    %v161 = vcvt.s32.f32 %v141
    %v162 = vcvt.s32.f32 %v142
    %v163 = vcvt.s32.f32 %v143
    %v164 = vcvt.s32.f32 %v144
    %v165 = vcvt.s32.f32 %v145
    %v166 = vcvt.s32.f32 %v146
    %v167 = vcvt.s32.f32 %v147
    %vm168 = vcmask 523264
    %v170 = vsel %vm168, %v148, 0
    %v173 = vsel %vm168, %v149, 0
    %v176 = vsel %vm168, %v150, 0
    %v179 = vsel %vm168, %v151, 0
    %v182 = vsel %vm168, %v152, 0
    %v185 = vsel %vm168, %v153, 0
    %v188 = vsel %vm168, %v154, 0
    %v191 = vsel %vm168, %v155, 0
    %v194 = vsel %vm168, %v156, 0
    %v197 = vsel %vm168, %v157, 0
    %v200 = vsel %vm168, %v158, 0
    %v203 = vsel %vm168, %v159, 0
    %v206 = vsel %vm168, %v160, 0
    %v209 = vsel %vm168, %v161, 0
    %v212 = vsel %vm168, %v162, 0
    %v215 = vsel %vm168, %v163, 0
    %v218 = vsel %vm168, %v164, 0
    %v221 = vsel %vm168, %v165, 0
    %v224 = vsel %vm168, %v166, 0
    %v227 = vsel %vm168, %v167, 0
    %229 = vmatpush.msra.mxu0 0.0
    %230 = vmatpush.msra.mxu0 0.0
    %231 = vmatpush.msra.mxu0 0.0
    %232 = vmatpush.msra.mxu0 0.0
    %233 = vmatpush.msra.mxu0 0.0
    %234 = vmatpush.msra.mxu0 0.0
    %235 = vmatpush.msra.mxu0 0.0
    %236 = vmatpush.msra.mxu0 0.0
    %237 = vmatpush.msra.mxu0 %v25
    %238 = vmatpush.msra.mxu0 %v24
    %239 = vmatpush.msra.mxu0 %v23
    %240 = vmatpush.msra.mxu0 %v22
    %241 = vmatpush.msra.mxu0 %v21
    %242 = vmatpush.msra.mxu0 %v20
    %243 = vmatpush.msra.mxu0 %v19
    %244 = vmatpush.msra.mxu0 %v18
    %245 = vmatmul.f32.gmra.mxu0 %v170
    %v246 = vpop.f32.mrf.mxu0
    %v247 = vadd.f32 0.0, %v246
    %248 = vmatmul.f32.gmra.mxu0 %v173
    %v249 = vpop.f32.mrf.mxu0
    %v250 = vadd.f32 0.0, %v249
    %251 = vmatmul.f32.gmra.mxu0 %v176
    %v252 = vpop.f32.mrf.mxu0
    %v253 = vadd.f32 0.0, %v252
    %254 = vmatmul.f32.gmra.mxu0 %v179
    %v255 = vpop.f32.mrf.mxu0
    %v256 = vadd.f32 0.0, %v255
    %257 = vmatmul.f32.gmra.mxu0 %v182
    %v258 = vpop.f32.mrf.mxu0
    %v259 = vadd.f32 0.0, %v258
    %260 = vmatmul.f32.gmra.mxu0 %v185
    %v261 = vpop.f32.mrf.mxu0
    %v262 = vadd.f32 0.0, %v261
    %263 = vmatmul.f32.gmra.mxu0 %v188
    %v264 = vpop.f32.mrf.mxu0
    %v265 = vadd.f32 0.0, %v264
    %266 = vmatmul.f32.gmra.mxu0 %v191
    %v267 = vpop.f32.mrf.mxu0
    %v268 = vadd.f32 0.0, %v267
    %269 = vmatmul.f32.gmra.mxu0 %v194
    %v270 = vpop.f32.mrf.mxu0
    %v271 = vadd.f32 0.0, %v270
    %272 = vmatmul.f32.gmra.mxu0 %v197
    %v273 = vpop.f32.mrf.mxu0
    %v274 = vadd.f32 0.0, %v273
    %275 = vmatmul.f32.gmra.mxu0 %v200
    %v276 = vpop.f32.mrf.mxu0
    %v277 = vadd.f32 0.0, %v276
    %278 = vmatmul.f32.gmra.mxu0 %v203
    %v279 = vpop.f32.mrf.mxu0
    %v280 = vadd.f32 0.0, %v279
    %281 = vmatmul.f32.gmra.mxu0 %v206
    %v282 = vpop.f32.mrf.mxu0
    %v283 = vadd.f32 0.0, %v282
    %284 = vmatmul.f32.gmra.mxu0 %v209
    %v285 = vpop.f32.mrf.mxu0
    %v286 = vadd.f32 0.0, %v285
    %287 = vmatmul.f32.gmra.mxu0 %v212
    %v288 = vpop.f32.mrf.mxu0
    %v289 = vadd.f32 0.0, %v288
    %290 = vmatmul.f32.gmra.mxu0 %v215
    %v291 = vpop.f32.mrf.mxu0
    %v292 = vadd.f32 0.0, %v291
    %293 = vmatmul.f32.gmra.mxu0 %v218
    %v294 = vpop.f32.mrf.mxu0
    %v295 = vadd.f32 0.0, %v294
    %296 = vmatmul.f32.gmra.mxu0 %v221
    %v297 = vpop.f32.mrf.mxu0
    %v298 = vadd.f32 0.0, %v297
    %299 = vmatmul.f32.gmra.mxu0 %v224
    %v300 = vpop.f32.mrf.mxu0
    %v301 = vadd.f32 0.0, %v300
    %302 = vmatmul.f32.gmra.mxu0 %v227
    %v303 = vpop.f32.mrf.mxu0
    %v304 = vadd.f32 0.0, %v303
    %305 = vdwg.mxu0
    %v306 = vmul.f32 %v247, %v247
    %v307 = vmul.f32 %v250, %v250
    %v308 = vmul.f32 %v253, %v253
    %v309 = vmul.f32 %v256, %v256
    %v310 = vmul.f32 %v259, %v259
    %v311 = vmul.f32 %v262, %v262
    %v312 = vmul.f32 %v265, %v265
    %v313 = vmul.f32 %v268, %v268
    %v314 = vmul.f32 %v271, %v271
    %v315 = vmul.f32 %v274, %v274
    %v316 = vmul.f32 %v277, %v277
    %v317 = vmul.f32 %v280, %v280
    %v318 = vmul.f32 %v283, %v283
    %v319 = vmul.f32 %v286, %v286
    %v320 = vmul.f32 %v289, %v289
    %v321 = vmul.f32 %v292, %v292
    %v322 = vmul.f32 %v295, %v295
    %v323 = vmul.f32 %v298, %v298
    %v324 = vmul.f32 %v301, %v301
    %v325 = vmul.f32 %v304, %v304
    %vm326 = vcmask 261120
    %v327 = vsel %vm326, %v306, 0.0
    %328 = vadd.xlane.f32.xlu0 %v327
    %v329 = vpop.xlane.xlu0 %328
    %v330 = vsel %vm326, %v307, 0.0
    %331 = vadd.xlane.f32.xlu0 %v330
    %v332 = vpop.xlane.xlu0 %331
    %v333 = vsel %vm326, %v308, 0.0
    %334 = vadd.xlane.f32.xlu0 %v333
    %v335 = vpop.xlane.xlu0 %334
    %v336 = vsel %vm326, %v309, 0.0
    %337 = vadd.xlane.f32.xlu0 %v336
    %v338 = vpop.xlane.xlu0 %337
    %v339 = vsel %vm326, %v310, 0.0
    %340 = vadd.xlane.f32.xlu0 %v339
    %v341 = vpop.xlane.xlu0 %340
    %v342 = vsel %vm326, %v311, 0.0
    %343 = vadd.xlane.f32.xlu0 %v342
    %v344 = vpop.xlane.xlu0 %343
    %v345 = vsel %vm326, %v312, 0.0
    %346 = vadd.xlane.f32.xlu0 %v345
    %v347 = vpop.xlane.xlu0 %346
    %v348 = vsel %vm326, %v313, 0.0
    %349 = vadd.xlane.f32.xlu0 %v348
    %v350 = vpop.xlane.xlu0 %349
    %v351 = vsel %vm326, %v314, 0.0
    %352 = vadd.xlane.f32.xlu0 %v351
    %v353 = vpop.xlane.xlu0 %352
    %v354 = vsel %vm326, %v315, 0.0
    %355 = vadd.xlane.f32.xlu0 %v354
    %v356 = vpop.xlane.xlu0 %355
    %v357 = vsel %vm326, %v316, 0.0
    %358 = vadd.xlane.f32.xlu0 %v357
    %v359 = vpop.xlane.xlu0 %358
    %v360 = vsel %vm326, %v317, 0.0
    %361 = vadd.xlane.f32.xlu0 %v360
    %v362 = vpop.xlane.xlu0 %361
    %v363 = vsel %vm326, %v318, 0.0
    %364 = vadd.xlane.f32.xlu0 %v363
    %v365 = vpop.xlane.xlu0 %364
    %v366 = vsel %vm326, %v319, 0.0
    %367 = vadd.xlane.f32.xlu0 %v366
    %v368 = vpop.xlane.xlu0 %367
    %v369 = vsel %vm326, %v320, 0.0
    %370 = vadd.xlane.f32.xlu0 %v369
    %v371 = vpop.xlane.xlu0 %370
    %v372 = vsel %vm326, %v321, 0.0
    %373 = vadd.xlane.f32.xlu0 %v372
    %v374 = vpop.xlane.xlu0 %373
    %v375 = vsel %vm326, %v322, 0.0
    %376 = vadd.xlane.f32.xlu0 %v375
    %v377 = vpop.xlane.xlu0 %376
    %v378 = vsel %vm326, %v323, 0.0
    %379 = vadd.xlane.f32.xlu0 %v378
    %v380 = vpop.xlane.xlu0 %379
    %v381 = vsel %vm326, %v324, 0.0
    %382 = vadd.xlane.f32.xlu0 %v381
    %v383 = vpop.xlane.xlu0 %382
    %v384 = vsel %vm326, %v325, 0.0
    %385 = vadd.xlane.f32.xlu0 %v384
    %v386 = vpop.xlane.xlu0 %385
    %v387 = vmax.f32 %v329, 1e-24
    %v388 = vmax.f32 %v332, 1e-24
    %v389 = vmax.f32 %v335, 1e-24
    %v390 = vmax.f32 %v338, 1e-24
    %v391 = vmax.f32 %v341, 1e-24
    %v392 = vmax.f32 %v344, 1e-24
    %v393 = vmax.f32 %v347, 1e-24
    %v394 = vmax.f32 %v350, 1e-24
    %v395 = vmax.f32 %v353, 1e-24
    %v396 = vmax.f32 %v356, 1e-24
    %v397 = vmax.f32 %v359, 1e-24
    %v398 = vmax.f32 %v362, 1e-24
    %v399 = vmax.f32 %v365, 1e-24
    %v400 = vmax.f32 %v368, 1e-24
    %v401 = vmax.f32 %v371, 1e-24
    %v402 = vmax.f32 %v374, 1e-24
    %v403 = vmax.f32 %v377, 1e-24
    %v404 = vmax.f32 %v380, 1e-24
    %v405 = vmax.f32 %v383, 1e-24
    %v406 = vmax.f32 %v386, 1e-24
    %v407 = vrsqrt.pop %v387
    %v408 = vmul.f32 %v407, %v387
    %v409 = vmul.f32 %v408, %v407
    %v410 = vmul.f32 0.5, %v409
    %v411 = vsub.f32 1.5, %v410
    %v412 = vmul.f32 %v407, %v411
    %vm413 = vweird.f32 %v387
    %vm414 = vweird.f32 %v407
    %vm415 = vmor %vm413, %vm414
    %v416 = vsel %vm415, %v407, %v412
    %v417 = vrsqrt.pop %v388
    %v418 = vmul.f32 %v417, %v388
    %v419 = vmul.f32 %v418, %v417
    %v420 = vmul.f32 0.5, %v419
    %v421 = vsub.f32 1.5, %v420
    %v422 = vmul.f32 %v417, %v421
    %vm423 = vweird.f32 %v388
    %vm424 = vweird.f32 %v417
    %vm425 = vmor %vm423, %vm424
    %v426 = vsel %vm425, %v417, %v422
    %v427 = vrsqrt.pop %v389
    %v428 = vmul.f32 %v427, %v389
    %v429 = vmul.f32 %v428, %v427
    %v430 = vmul.f32 0.5, %v429
    %v431 = vsub.f32 1.5, %v430
    %v432 = vmul.f32 %v427, %v431
    %vm433 = vweird.f32 %v389
    %vm434 = vweird.f32 %v427
    %vm435 = vmor %vm433, %vm434
    %v436 = vsel %vm435, %v427, %v432
    %v437 = vrsqrt.pop %v390
    %v438 = vmul.f32 %v437, %v390
    %v439 = vmul.f32 %v438, %v437
    %v440 = vmul.f32 0.5, %v439
    %v441 = vsub.f32 1.5, %v440
    %v442 = vmul.f32 %v437, %v441
    %vm443 = vweird.f32 %v390
    %vm444 = vweird.f32 %v437
    %vm445 = vmor %vm443, %vm444
    %v446 = vsel %vm445, %v437, %v442
    %v447 = vrsqrt.pop %v391
    %v448 = vmul.f32 %v447, %v391
    %v449 = vmul.f32 %v448, %v447
    %v450 = vmul.f32 0.5, %v449
    %v451 = vsub.f32 1.5, %v450
    %v452 = vmul.f32 %v447, %v451
    %vm453 = vweird.f32 %v391
    %vm454 = vweird.f32 %v447
    %vm455 = vmor %vm453, %vm454
    %v456 = vsel %vm455, %v447, %v452
    %v457 = vrsqrt.pop %v392
    %v458 = vmul.f32 %v457, %v392
    %v459 = vmul.f32 %v458, %v457
    %v460 = vmul.f32 0.5, %v459
    %v461 = vsub.f32 1.5, %v460
    %v462 = vmul.f32 %v457, %v461
    %vm463 = vweird.f32 %v392
    %vm464 = vweird.f32 %v457
    %vm465 = vmor %vm463, %vm464
    %v466 = vsel %vm465, %v457, %v462
    %v467 = vrsqrt.pop %v393
    %v468 = vmul.f32 %v467, %v393
    %v469 = vmul.f32 %v468, %v467
    %v470 = vmul.f32 0.5, %v469
    %v471 = vsub.f32 1.5, %v470
    %v472 = vmul.f32 %v467, %v471
    %vm473 = vweird.f32 %v393
    %vm474 = vweird.f32 %v467
    %vm475 = vmor %vm473, %vm474
    %v476 = vsel %vm475, %v467, %v472
    %v477 = vrsqrt.pop %v394
    %v478 = vmul.f32 %v477, %v394
    %v479 = vmul.f32 %v478, %v477
    %v480 = vmul.f32 0.5, %v479
    %v481 = vsub.f32 1.5, %v480
    %v482 = vmul.f32 %v477, %v481
    %vm483 = vweird.f32 %v394
    %vm484 = vweird.f32 %v477
    %vm485 = vmor %vm483, %vm484
    %v486 = vsel %vm485, %v477, %v482
    %v487 = vrsqrt.pop %v395
    %v488 = vmul.f32 %v487, %v395
    %v489 = vmul.f32 %v488, %v487
    %v490 = vmul.f32 0.5, %v489
    %v491 = vsub.f32 1.5, %v490
    %v492 = vmul.f32 %v487, %v491
    %vm493 = vweird.f32 %v395
    %vm494 = vweird.f32 %v487
    %vm495 = vmor %vm493, %vm494
    %v496 = vsel %vm495, %v487, %v492
    %v497 = vrsqrt.pop %v396
    %v498 = vmul.f32 %v497, %v396
    %v499 = vmul.f32 %v498, %v497
    %v500 = vmul.f32 0.5, %v499
    %v501 = vsub.f32 1.5, %v500
    %v502 = vmul.f32 %v497, %v501
    %vm503 = vweird.f32 %v396
    %vm504 = vweird.f32 %v497
    %vm505 = vmor %vm503, %vm504
    %v506 = vsel %vm505, %v497, %v502
    %v507 = vrsqrt.pop %v397
    %v508 = vmul.f32 %v507, %v397
    %v509 = vmul.f32 %v508, %v507
    %v510 = vmul.f32 0.5, %v509
    %v511 = vsub.f32 1.5, %v510
    %v512 = vmul.f32 %v507, %v511
    %vm513 = vweird.f32 %v397
    %vm514 = vweird.f32 %v507
    %vm515 = vmor %vm513, %vm514
    %v516 = vsel %vm515, %v507, %v512
    %v517 = vrsqrt.pop %v398
    %v518 = vmul.f32 %v517, %v398
    %v519 = vmul.f32 %v518, %v517
    %v520 = vmul.f32 0.5, %v519
    %v521 = vsub.f32 1.5, %v520
    %v522 = vmul.f32 %v517, %v521
    %vm523 = vweird.f32 %v398
    %vm524 = vweird.f32 %v517
    %vm525 = vmor %vm523, %vm524
    %v526 = vsel %vm525, %v517, %v522
    %v527 = vrsqrt.pop %v399
    %v528 = vmul.f32 %v527, %v399
    %v529 = vmul.f32 %v528, %v527
    %v530 = vmul.f32 0.5, %v529
    %v531 = vsub.f32 1.5, %v530
    %v532 = vmul.f32 %v527, %v531
    %vm533 = vweird.f32 %v399
    %vm534 = vweird.f32 %v527
    %vm535 = vmor %vm533, %vm534
    %v536 = vsel %vm535, %v527, %v532
    %v537 = vrsqrt.pop %v400
    %v538 = vmul.f32 %v537, %v400
    %v539 = vmul.f32 %v538, %v537
    %v540 = vmul.f32 0.5, %v539
    %v541 = vsub.f32 1.5, %v540
    %v542 = vmul.f32 %v537, %v541
    %vm543 = vweird.f32 %v400
    %vm544 = vweird.f32 %v537
    %vm545 = vmor %vm543, %vm544
    %v546 = vsel %vm545, %v537, %v542
    %v547 = vrsqrt.pop %v401
    %v548 = vmul.f32 %v547, %v401
    %v549 = vmul.f32 %v548, %v547
    %v550 = vmul.f32 0.5, %v549
    %v551 = vsub.f32 1.5, %v550
    %v552 = vmul.f32 %v547, %v551
    %vm553 = vweird.f32 %v401
    %vm554 = vweird.f32 %v547
    %vm555 = vmor %vm553, %vm554
    %v556 = vsel %vm555, %v547, %v552
    %v557 = vrsqrt.pop %v402
    %v558 = vmul.f32 %v557, %v402
    %v559 = vmul.f32 %v558, %v557
    %v560 = vmul.f32 0.5, %v559
    %v561 = vsub.f32 1.5, %v560
    %v562 = vmul.f32 %v557, %v561
    %vm563 = vweird.f32 %v402
    %vm564 = vweird.f32 %v557
    %vm565 = vmor %vm563, %vm564
    %v566 = vsel %vm565, %v557, %v562
    %v567 = vrsqrt.pop %v403
    %v568 = vmul.f32 %v567, %v403
    %v569 = vmul.f32 %v568, %v567
    %v570 = vmul.f32 0.5, %v569
    %v571 = vsub.f32 1.5, %v570
    %v572 = vmul.f32 %v567, %v571
    %vm573 = vweird.f32 %v403
    %vm574 = vweird.f32 %v567
    %vm575 = vmor %vm573, %vm574
    %v576 = vsel %vm575, %v567, %v572
    %v577 = vrsqrt.pop %v404
    %v578 = vmul.f32 %v577, %v404
    %v579 = vmul.f32 %v578, %v577
    %v580 = vmul.f32 0.5, %v579
    %v581 = vsub.f32 1.5, %v580
    %v582 = vmul.f32 %v577, %v581
    %vm583 = vweird.f32 %v404
    %vm584 = vweird.f32 %v577
    %vm585 = vmor %vm583, %vm584
    %v586 = vsel %vm585, %v577, %v582
    %v587 = vrsqrt.pop %v405
    %v588 = vmul.f32 %v587, %v405
    %v589 = vmul.f32 %v588, %v587
    %v590 = vmul.f32 0.5, %v589
    %v591 = vsub.f32 1.5, %v590
    %v592 = vmul.f32 %v587, %v591
    %vm593 = vweird.f32 %v405
    %vm594 = vweird.f32 %v587
    %vm595 = vmor %vm593, %vm594
    %v596 = vsel %vm595, %v587, %v592
    %v597 = vrsqrt.pop %v406
    %v598 = vmul.f32 %v597, %v406
    %v599 = vmul.f32 %v598, %v597
    %v600 = vmul.f32 0.5, %v599
    %v601 = vsub.f32 1.5, %v600
    %v602 = vmul.f32 %v597, %v601
    %vm603 = vweird.f32 %v406
    %vm604 = vweird.f32 %v597
    %vm605 = vmor %vm603, %vm604
    %v606 = vsel %vm605, %v597, %v602
    %v607 = vmul.f32 %v247, %v416
    %v608 = vmul.f32 %v250, %v426
    %v609 = vmul.f32 %v253, %v436
    %v610 = vmul.f32 %v256, %v446
    %v611 = vmul.f32 %v259, %v456
    %v612 = vmul.f32 %v262, %v466
    %v613 = vmul.f32 %v265, %v476
    %v614 = vmul.f32 %v268, %v486
    %v615 = vmul.f32 %v271, %v496
    %v616 = vmul.f32 %v274, %v506
    %v617 = vmul.f32 %v277, %v516
    %v618 = vmul.f32 %v280, %v526
    %v619 = vmul.f32 %v283, %v536
    %v620 = vmul.f32 %v286, %v546
    %v621 = vmul.f32 %v289, %v556
    %v622 = vmul.f32 %v292, %v566
    %v623 = vmul.f32 %v295, %v576
    %v624 = vmul.f32 %v298, %v586
    %v625 = vmul.f32 %v301, %v596
    %v626 = vmul.f32 %v304, %v606
    %v627 = vld [vmem:[%s3] sm:$0xf]
    %v628 = vld [vmem:[%s1] sm:$0xff]
    %v629 = vld [vmem:[%s1 + $0x8] sm:$0xff]
    %vm630 = vcmp.eq.s32.totalorder %v628, 0
    %vm631 = vcmp.eq.s32.totalorder %v629, 0
    %v632 = vsel %vm630, 1, 0
    %v633 = vsel %vm631, 1, 0
    %634 = vset.pattern.permute.xlu0 0
    %635 = vperm.xlu0 %634, %v632
    %v636 = vpop.permute.xlu0 %635
    %637 = vset.pattern.permute.xlu0 0
    %638 = vperm.xlu0 %637, %v633
    %v639 = vpop.permute.xlu0 %638
    %vm640 = vcmp.eq.s32.totalorder %v636, 1
    %vm641 = vcmp.eq.s32.totalorder %v639, 1
    %v642 = vperm.slane %v627, 0
    %v643 = vsel %vm640, %v642, 0.0
    %v644 = vsel %vm641, %v642, 0.0
    %vm645 = vcmp.eq.s32.totalorder %v628, 1
    %vm646 = vcmp.eq.s32.totalorder %v629, 1
    %v647 = vsel %vm645, 1, 0
    %v648 = vsel %vm646, 1, 0
    %649 = vset.pattern.permute.xlu0 0
    %650 = vperm.xlu0 %649, %v647
    %v651 = vpop.permute.xlu0 %650
    %652 = vset.pattern.permute.xlu0 0
    %653 = vperm.xlu0 %652, %v648
    %v654 = vpop.permute.xlu0 %653
    %vm655 = vcmp.eq.s32.totalorder %v651, 1
    %vm656 = vcmp.eq.s32.totalorder %v654, 1
    %v657 = vperm.slane %v627, 1
    %v658 = vsel %vm655, %v657, %v643
    %v659 = vsel %vm656, %v657, %v644
    %vm660 = vcmp.eq.s32.totalorder %v628, 2
    %vm661 = vcmp.eq.s32.totalorder %v629, 2
    %v662 = vsel %vm660, 1, 0
    %v663 = vsel %vm661, 1, 0
    %664 = vset.pattern.permute.xlu0 0
    %665 = vperm.xlu0 %664, %v662
    %v666 = vpop.permute.xlu0 %665
    %667 = vset.pattern.permute.xlu0 0
    %668 = vperm.xlu0 %667, %v663
    %v669 = vpop.permute.xlu0 %668
    %vm670 = vcmp.eq.s32.totalorder %v666, 1
    %vm671 = vcmp.eq.s32.totalorder %v669, 1
    %v672 = vperm.slane %v627, 2
    %v673 = vsel %vm670, %v672, %v658
    %v674 = vsel %vm671, %v672, %v659
    %vm675 = vcmp.eq.s32.totalorder %v628, 3
    %vm676 = vcmp.eq.s32.totalorder %v629, 3
    %v677 = vsel %vm675, 1, 0
    %v678 = vsel %vm676, 1, 0
    %679 = vset.pattern.permute.xlu0 0
    %680 = vperm.xlu0 %679, %v677
    %v681 = vpop.permute.xlu0 %680
    %682 = vset.pattern.permute.xlu0 0
    %683 = vperm.xlu0 %682, %v678
    %v684 = vpop.permute.xlu0 %683
    %vm685 = vcmp.eq.s32.totalorder %v681, 1
    %vm686 = vcmp.eq.s32.totalorder %v684, 1
    %v687 = vperm.slane %v627, 3
    %v688 = vsel %vm685, %v687, %v673
    %v689 = vsel %vm686, %v687, %v674
    %v690 = vmul.f32 %v688, %v688
    %v691 = vmul.f32 %v689, %v689
    %v692 = vsel %vm326, %v690, 0.0
    %693 = vadd.xlane.f32.xlu0 %v692
    %v694 = vpop.xlane.xlu0 %693
    %v695 = vsel %vm326, %v691, 0.0
    %696 = vadd.xlane.f32.xlu0 %v695
    %v697 = vpop.xlane.xlu0 %696
    %v698 = vmax.f32 %v694, 1e-24
    %v699 = vmax.f32 %v697, 1e-24
    %v700 = vrsqrt.pop %v698
    %v701 = vmul.f32 %v700, %v698
    %v702 = vmul.f32 %v701, %v700
    %v703 = vmul.f32 0.5, %v702
    %v704 = vsub.f32 1.5, %v703
    %v705 = vmul.f32 %v700, %v704
    %vm706 = vweird.f32 %v698
    %vm707 = vweird.f32 %v700
    %vm708 = vmor %vm706, %vm707
    %v709 = vsel %vm708, %v700, %v705
    %v710 = vrsqrt.pop %v699
    %v711 = vmul.f32 %v710, %v699
    %v712 = vmul.f32 %v711, %v710
    %v713 = vmul.f32 0.5, %v712
    %v714 = vsub.f32 1.5, %v713
    %v715 = vmul.f32 %v710, %v714
    %vm716 = vweird.f32 %v699
    %vm717 = vweird.f32 %v710
    %vm718 = vmor %vm716, %vm717
    %v719 = vsel %vm718, %v710, %v715
    %v720 = vmul.f32 %v688, %v709
    %v721 = vmul.f32 %v689, %v719
    %v722 = vsub.f32 %v607, %v617
    %v723 = vsub.f32 %v608, %v618
    %v724 = vsub.f32 %v609, %v619
    %v725 = vsub.f32 %v610, %v620
    %v726 = vsub.f32 %v611, %v621
    %v727 = vsub.f32 %v612, %v622
    %v728 = vsub.f32 %v613, %v623
    %v729 = vsub.f32 %v614, %v624
    %v730 = vsub.f32 %v615, %v625
    %v731 = vsub.f32 %v616, %v626
    %v732 = vadd.f32 %v722, %v720
    %v733 = vadd.f32 %v723, %v721
    %v734 = vand.u32 2147483647, %v732
    %v735 = vand.u32 2147483647, %v733
    %v736 = vsel %vm326, %v734, 0.0
    %737 = vadd.xlane.f32.xlu0 %v736
    %v738 = vpop.xlane.xlu0 %737
    %v739 = vsel %vm326, %v735, 0.0
    %740 = vadd.xlane.f32.xlu0 %v739
    %v741 = vpop.xlane.xlu0 %740
    %v742 = vadd.f32 %v724, %v720
    %v743 = vadd.f32 %v725, %v721
    %v744 = vand.u32 2147483647, %v742
    %v745 = vand.u32 2147483647, %v743
    %v746 = vsel %vm326, %v744, 0.0
    %747 = vadd.xlane.f32.xlu0 %v746
    %v748 = vpop.xlane.xlu0 %747
    %v749 = vsel %vm326, %v745, 0.0
    %750 = vadd.xlane.f32.xlu0 %v749
    %v751 = vpop.xlane.xlu0 %750
    %v752 = vsub.f32 %v738, %v748
    %v753 = vsub.f32 %v741, %v751
    %v754 = vmax.f32 %v752, -5.0
    %v755 = vmax.f32 %v753, -5.0
    %v756 = vadd.f32 %v754, 5.0
    %v757 = vadd.f32 %v755, 5.0
    %v758 = vadd.f32 %v756, 0.0
    %v759 = vadd.f32 %v757, 0.0
    %v760 = vadd.f32 %v726, %v720
    %v761 = vadd.f32 %v727, %v721
    %v762 = vand.u32 2147483647, %v760
    %v763 = vand.u32 2147483647, %v761
    %v764 = vsel %vm326, %v762, 0.0
    %765 = vadd.xlane.f32.xlu0 %v764
    %v766 = vpop.xlane.xlu0 %765
    %v767 = vsel %vm326, %v763, 0.0
    %768 = vadd.xlane.f32.xlu0 %v767
    %v769 = vpop.xlane.xlu0 %768
    %v770 = vsub.f32 %v738, %v766
    %v771 = vsub.f32 %v741, %v769
    %v772 = vmax.f32 %v770, -5.0
    %v773 = vmax.f32 %v771, -5.0
    %v774 = vadd.f32 %v772, 5.0
    %v775 = vadd.f32 %v773, 5.0
    %v776 = vadd.f32 %v758, %v774
    %v777 = vadd.f32 %v759, %v775
    %v778 = vadd.f32 %v728, %v720
    %v779 = vadd.f32 %v729, %v721
    %v780 = vand.u32 2147483647, %v778
    %v781 = vand.u32 2147483647, %v779
    %v782 = vsel %vm326, %v780, 0.0
    %783 = vadd.xlane.f32.xlu0 %v782
    %v784 = vpop.xlane.xlu0 %783
    %v785 = vsel %vm326, %v781, 0.0
    %786 = vadd.xlane.f32.xlu0 %v785
    %v787 = vpop.xlane.xlu0 %786
    %v788 = vsub.f32 %v738, %v784
    %v789 = vsub.f32 %v741, %v787
    %v790 = vmax.f32 %v788, -5.0
    %v791 = vmax.f32 %v789, -5.0
    %v792 = vadd.f32 %v790, 5.0
    %v793 = vadd.f32 %v791, 5.0
    %v794 = vadd.f32 %v776, %v792
    %v795 = vadd.f32 %v777, %v793
    %v796 = vadd.f32 %v730, %v720
    %v797 = vadd.f32 %v731, %v721
    %v798 = vand.u32 2147483647, %v796
    %v799 = vand.u32 2147483647, %v797
    %v800 = vsel %vm326, %v798, 0.0
    %801 = vadd.xlane.f32.xlu0 %v800
    %v802 = vpop.xlane.xlu0 %801
    %v803 = vsel %vm326, %v799, 0.0
    %804 = vadd.xlane.f32.xlu0 %v803
    %v805 = vpop.xlane.xlu0 %804
    %v806 = vsub.f32 %v738, %v802
    %v807 = vsub.f32 %v741, %v805
    %v808 = vmax.f32 %v806, -5.0
    %v809 = vmax.f32 %v807, -5.0
    %v810 = vadd.f32 %v808, 5.0
    %v811 = vadd.f32 %v809, 5.0
    %v812 = vadd.f32 %v794, %v810
    %v813 = vadd.f32 %v795, %v811
    %vm814 = vcmask 7168
    %v815 = vsel %vm814, %v812, 0.0
    %v816 = vsel %vm814, %v813, 0.0
    %v817 = vadd.f32 %v815, %v816
    %818 = vadd.xlane.f32.xlu0 %v817
    %v819 = vpop.xlane.xlu0 %818
    %v820 = vrot.slane %v819, 4
    %v821 = vadd.f32 %v819, %v820
    %v822 = vrot.slane %v821, 2
    %v823 = vadd.f32 %v821, %v822
    %v824 = vrot.slane %v823, 1
    %v825 = vadd.f32 %v823, %v824
    %s826 = vtos %v825
    %s827 = smul.f32 %s826, 0.015625
    %s828 = scalar_lea.smem [#allocation2], 0
    %829 = sst [smem:[%s828]] %s827
    // Predicated region
    $region18: #{tpu_custom_call.1} parent=1 // pred_check
      _
    $region19: #{tpu_custom_call.1} parent=1 // pred_check_branch
      %831 = sbr.rel (0) target = $region21
    $region20: #{tpu_custom_call.1} parent=1 // pred_region
      %833 = vsyncadd [#allocation3], 0
      %s835 = sshll.u32 %s4, 4
      %s836 = int_to_ptr.hbm [resolvable:$true] %s835
      %838 = dma.smem_to_hbm [#allocation2], 16, %s836, [#allocation3]
    $region21: #{tpu_custom_call.1} parent=1 // pred_fallthru
      _
    // Predicated region
    $region22: #{tpu_custom_call.1} parent=1 // pred_check
      _
    $region23: #{tpu_custom_call.1} parent=1 // pred_check_branch
      %840 = sbr.rel (0) target = $region25
    $region24: #{tpu_custom_call.1} parent=1 // pred_region
      %842 = dma.done [#allocation3], 16
    $region25: #{tpu_custom_call.1} parent=1 // pred_fallthru
      _
    %843 = sfence
    %844 = vsyncpa [#allocation3], 1

</llo_original>
